<compile_context>
chip_gen: v7x
topology: tpu7x:2x2x1
jax: 0.10.0
libtpu: 0.0.40
codegen_flags: <defaults>
</compile_context>

<pallas_src>
import jax
import jax.numpy as jnp
from jax import lax
from jax.experimental import pallas as pl
from jax.experimental.pallas import tpu as pltpu

SUBLANES = 8
LANES = 128


def torch_rnn_kernel(tok_ref, emb_ref, wih_ref, whh_ref, wcls_ref, bcls_ref,
                     out_ref, h_scr):
    # tok_ref:  (T*Bp, 1)   time-major flattened token ids, int32
    # emb_ref:  (Vp, D)     embedding table, vocab zero-padded to 128 lanes
    # wih_ref:  (D, Hp)     input->hidden weights, H zero-padded to 128 lanes
    # whh_ref:  (Hp, Hp)
    # wcls_ref: (Hp, Cp)    classifier weights, class dim zero-padded to 128
    # bcls_ref: (1, Cp)
    # out_ref:  (T, Bp, Cp) softmax over time (axis 0)
    # h_scr:    (T*Bp, Hp)  VMEM scratch holding all hidden states
    T, Bp, Cp = out_ref.shape
    TB = T * Bp
    Vp = emb_ref.shape[0]
    Hp = whh_ref.shape[0]

    # Embedding lookup as a one-hot MXU matmul (exact row selection).
    tok = tok_ref[...]                                                  # (TB, 1)
    onehot = (lax.broadcasted_iota(jnp.int32, (TB, Vp), 1) == tok
              ).astype(jnp.float32)                                     # (TB, Vp)
    x = jnp.dot(onehot, emb_ref[...], preferred_element_type=jnp.float32)  # (TB, D)

    # Input projection for ALL timesteps as one 2-D MXU matmul.
    xw = jnp.dot(x, wih_ref[...], preferred_element_type=jnp.float32)   # (TB, Hp)

    # Elman recurrence: h_t = tanh(x_t @ W_ih + h_{t-1} @ W_hh), no bias.
    # Bp is a multiple of 8 and Hp a multiple of 128, so every slice/store
    # below is sublane-aligned and lane-dense.
    whh = whh_ref[...]
    h = jnp.zeros((Bp, Hp), jnp.float32)
    for t in range(T):                                                  # static unroll (T small)
        xt = xw[t * Bp:(t + 1) * Bp, :]
        h = jnp.tanh(xt + jnp.dot(h, whh, preferred_element_type=jnp.float32))
        h_scr[pl.ds(t * Bp, Bp), :] = h

    hidden = h_scr[...]                                                 # (TB, Hp)

    # Classifier as one 2-D MXU matmul with lane-dense (Cp=128) columns.
    logits = (jnp.dot(hidden, wcls_ref[...], preferred_element_type=jnp.float32)
              + bcls_ref[...])

    # torch.softmax(x, dim=1) with batch_first=True == softmax over the TIME axis.
    lg = logits.reshape(T, Bp, Cp)
    m = jnp.max(lg, axis=0, keepdims=True)
    e = jnp.exp(lg - m)
    denom = jnp.sum(e, axis=0, keepdims=True)
    out_ref[...] = e * pl.reciprocal(denom, approx=False)


def torch_rnn_forward(tokens, emb, w_ih, w_hh, w_cls, b_cls):
    """tokens: (B, T) int32. Returns y_pred (B, T, sentence_length+1) f32."""
    B, T = tokens.shape
    V, D = emb.shape
    H = w_ih.shape[1]
    C = w_cls.shape[1]
    Bp = pl.cdiv(B, SUBLANES) * SUBLANES        # pad batch to f32 sublanes
    Vp = pl.cdiv(V, LANES) * LANES              # pad vocab to lanes
    Hp = pl.cdiv(H, LANES) * LANES              # pad hidden to lanes
    Cp = pl.cdiv(C, LANES) * LANES              # pad classes to lanes

    # Pad batch with pad-token sequences, go time-major and flatten (XLA glue).
    tok_pad = jnp.zeros((Bp, T), jnp.int32).at[:B].set(tokens.astype(jnp.int32))
    tok_tm = jnp.transpose(tok_pad, (1, 0)).reshape(T * Bp, 1)

    # Zero-pad parameters out to lane-dense shapes (padding is exact: padded
    # hidden/class columns stay identically zero through the whole forward).
    emb_p = jnp.zeros((Vp, D), jnp.float32).at[:V].set(emb.astype(jnp.float32))
    w_ih_p = jnp.zeros((D, Hp), jnp.float32).at[:, :H].set(w_ih)
    w_hh_p = jnp.zeros((Hp, Hp), jnp.float32).at[:H, :H].set(w_hh)
    w_cls_p = jnp.zeros((Hp, Cp), jnp.float32).at[:H, :C].set(w_cls)
    b_cls_p = jnp.zeros((1, Cp), jnp.float32).at[:, :C].set(b_cls)

    out = pl.pallas_call(
        torch_rnn_kernel,
        out_shape=jax.ShapeDtypeStruct((T, Bp, Cp), jnp.float32),
        in_specs=[pl.BlockSpec(memory_space=pltpu.MemorySpace.VMEM)] * 6,
        out_specs=pl.BlockSpec(memory_space=pltpu.MemorySpace.VMEM),
        scratch_shapes=[pltpu.VMEM((T * Bp, Hp), jnp.float32)],
    )(tok_tm, emb_p, w_ih_p, w_hh_p, w_cls_p, b_cls_p)

    # Strip padding and return batch-first (B, T, C).
    return jnp.transpose(out[:, :B, :C], (1, 0, 2))


def reference_forward(tokens, emb, w_ih, w_hh, w_cls, b_cls):
    """Pure-JAX reference of the PyTorch forward (y=None branch)."""
    x = jnp.take(emb, tokens, axis=0).astype(jnp.float32)               # (B, T, D)
    B, T, _ = x.shape
    H = w_hh.shape[0]
    h = jnp.zeros((B, H), jnp.float32)
    hs = []
    for t in range(T):
        h = jnp.tanh(x[:, t, :] @ w_ih + h @ w_hh)
        hs.append(h)
    hidden = jnp.stack(hs, axis=1)
    logits = jnp.einsum("bth,hc->btc", hidden, w_cls) + b_cls[0]
    return jax.nn.softmax(logits, axis=1)                               # dim=1, per torch code


if __name__ == "__main__":
    vocab_size = 28          # len(vocab) in the original module
    input_size = 32
    hidden_size = 32
    sentence_length = 8
    num_classes = sentence_length + 1
    batch = 2

    key = jax.random.PRNGKey(0)
    k_emb, k_ih, k_hh, k_w, k_b, k_tok = jax.random.split(key, 6)

    # Deterministic synthetic parameters (module __init__ shapes).
    emb = jax.random.normal(k_emb, (vocab_size, input_size), jnp.float32) * 0.1
    emb = emb.at[0].set(0.0)                               # padding_idx=0
    # nn.RNN weight_ih_l0: (H, D), weight_hh_l0: (H, H) -> stored transposed.
    w_ih = jax.random.normal(k_ih, (input_size, hidden_size), jnp.float32) * 0.1
    w_hh = jax.random.normal(k_hh, (hidden_size, hidden_size), jnp.float32) * 0.1
    # nn.Linear(hidden_size, sentence_length+1): weight (C, H), bias (C,) -> transposed.
    w_cls = jax.random.normal(k_w, (hidden_size, num_classes), jnp.float32) * 0.1
    b_cls = jax.random.normal(k_b, (1, num_classes), jnp.float32) * 0.1

    tokens = jax.random.randint(k_tok, (batch, sentence_length), 0, vocab_size,
                                dtype=jnp.int32)

    y_pred = torch_rnn_forward(tokens, emb, w_ih, w_hh, w_cls, b_cls)
    y_pred = jax.block_until_ready(y_pred)

    y_ref = reference_forward(tokens, emb, w_ih, w_hh, w_cls, b_cls)
    assert y_pred.shape == (batch, sentence_length, num_classes)
    assert jnp.allclose(y_pred, y_ref, atol=1e-5, rtol=1e-5)

    # TODO(synk): training branch (CrossEntropyLoss on y) not implemented; only the
    # inference path (y=None) of forward() is reproduced.
    print("KERNEL_OK")
</pallas_src>

<mosaic_0001>
module attributes {stable_mosaic.version = 11 : i64} {
  func.func @torch_rnn_kernel(%arg0: memref<64x1xi32, #tpu.memory_space<vmem>>, %arg1: memref<128x32xf32, #tpu.memory_space<vmem>>, %arg2: memref<32x128xf32, #tpu.memory_space<vmem>>, %arg3: memref<128x128xf32, #tpu.memory_space<vmem>>, %arg4: memref<128x128xf32, #tpu.memory_space<vmem>>, %arg5: memref<1x128xf32, #tpu.memory_space<vmem>>, %arg6: memref<8x8x128xf32, #tpu.memory_space<vmem>>, %arg7: memref<64x128xf32, #tpu.memory_space<vmem>>) attributes {dimension_semantics = [], scalar_prefetch = 0 : i64, scratch_operands = 1 : i64, tpu.core_type = #tpu.core_type<tc>} {
    %c0 = arith.constant 0 : index
    %c0_0 = arith.constant 0 : index
    %0 = vector.load %arg0[%c0, %c0_0] : memref<64x1xi32, #tpu.memory_space<vmem>>, vector<64x1xi32>
    %1 = tpu.iota {dimensions = array<i32: 1>} : vector<64x128xi32>
    %2 = vector.broadcast %0 : vector<64x1xi32> to vector<64x128xi32>
    %3 = arith.cmpi eq, %1, %2 : vector<64x128xi32>
    %4 = arith.extui %3 : vector<64x128xi1> to vector<64x128xi32>
    %5 = arith.sitofp %4 : vector<64x128xi32> to vector<64x128xf32>
    %c0_1 = arith.constant 0 : index
    %c0_2 = arith.constant 0 : index
    %6 = vector.load %arg1[%c0_1, %c0_2] : memref<128x32xf32, #tpu.memory_space<vmem>>, vector<128x32xf32>
    %cst = arith.constant dense<0.000000e+00> : vector<64x32xf32>
    %7 = tpu.matmul %5, %6, %cst {dimension_numbers = #tpu.dot_dimension_numbers<[1], [0], [0], [1], [0, 0, 1, 1], [], []>} : vector<64x128xf32>, vector<128x32xf32>, vector<64x32xf32> -> vector<64x32xf32>
    %c0_3 = arith.constant 0 : index
    %c0_4 = arith.constant 0 : index
    %8 = vector.load %arg2[%c0_3, %c0_4] : memref<32x128xf32, #tpu.memory_space<vmem>>, vector<32x128xf32>
    %cst_5 = arith.constant dense<0.000000e+00> : vector<64x128xf32>
    %9 = tpu.matmul %7, %8, %cst_5 {dimension_numbers = #tpu.dot_dimension_numbers<[1], [0], [0], [1], [0, 0, 1, 1], [], []>} : vector<64x32xf32>, vector<32x128xf32>, vector<64x128xf32> -> vector<64x128xf32>
    %c0_6 = arith.constant 0 : index
    %c0_7 = arith.constant 0 : index
    %10 = vector.load %arg3[%c0_6, %c0_7] : memref<128x128xf32, #tpu.memory_space<vmem>>, vector<128x128xf32>
    %cst_8 = arith.constant 0.000000e+00 : f32
    %11 = vector.broadcast %cst_8 : f32 to vector<8x128xf32>
    %12 = vector.extract_strided_slice %9 {offsets = [0, 0], sizes = [8, 128], strides = [1, 1]} : vector<64x128xf32> to vector<8x128xf32>
    %cst_9 = arith.constant dense<0.000000e+00> : vector<8x128xf32>
    %13 = tpu.matmul %11, %10, %cst_9 {dimension_numbers = #tpu.dot_dimension_numbers<[1], [0], [0], [1], [0, 0, 1, 1], [], []>} : vector<8x128xf32>, vector<128x128xf32>, vector<8x128xf32> -> vector<8x128xf32>
    %14 = arith.addf %12, %13 : vector<8x128xf32>
    %15 = math.tanh %14 : vector<8x128xf32>
    %c0_10 = arith.constant 0 : index
    %c0_11 = arith.constant 0 : index
    %16 = vector.load %arg7[%c0_10, %c0_11] : memref<64x128xf32, #tpu.memory_space<vmem>>, vector<8x128xf32>
    tpu.vector_store %arg7[%c0_10, %c0_11], %15 {strides = array<i32>} : memref<64x128xf32, #tpu.memory_space<vmem>>, vector<8x128xf32>,
    %17 = vector.extract_strided_slice %9 {offsets = [8, 0], sizes = [8, 128], strides = [1, 1]} : vector<64x128xf32> to vector<8x128xf32>
    %cst_12 = arith.constant dense<0.000000e+00> : vector<8x128xf32>
    %18 = tpu.matmul %15, %10, %cst_12 {dimension_numbers = #tpu.dot_dimension_numbers<[1], [0], [0], [1], [0, 0, 1, 1], [], []>} : vector<8x128xf32>, vector<128x128xf32>, vector<8x128xf32> -> vector<8x128xf32>
    %19 = arith.addf %17, %18 : vector<8x128xf32>
    %20 = math.tanh %19 : vector<8x128xf32>
    %c8 = arith.constant 8 : index
    %c0_13 = arith.constant 0 : index
    %21 = vector.load %arg7[%c8, %c0_13] : memref<64x128xf32, #tpu.memory_space<vmem>>, vector<8x128xf32>
    tpu.vector_store %arg7[%c8, %c0_13], %20 {strides = array<i32>} : memref<64x128xf32, #tpu.memory_space<vmem>>, vector<8x128xf32>,
    %22 = vector.extract_strided_slice %9 {offsets = [16, 0], sizes = [8, 128], strides = [1, 1]} : vector<64x128xf32> to vector<8x128xf32>
    %cst_14 = arith.constant dense<0.000000e+00> : vector<8x128xf32>
    %23 = tpu.matmul %20, %10, %cst_14 {dimension_numbers = #tpu.dot_dimension_numbers<[1], [0], [0], [1], [0, 0, 1, 1], [], []>} : vector<8x128xf32>, vector<128x128xf32>, vector<8x128xf32> -> vector<8x128xf32>
    %24 = arith.addf %22, %23 : vector<8x128xf32>
    %25 = math.tanh %24 : vector<8x128xf32>
    %c16 = arith.constant 16 : index
    %c0_15 = arith.constant 0 : index
    %26 = vector.load %arg7[%c16, %c0_15] : memref<64x128xf32, #tpu.memory_space<vmem>>, vector<8x128xf32>
    tpu.vector_store %arg7[%c16, %c0_15], %25 {strides = array<i32>} : memref<64x128xf32, #tpu.memory_space<vmem>>, vector<8x128xf32>,
    %27 = vector.extract_strided_slice %9 {offsets = [24, 0], sizes = [8, 128], strides = [1, 1]} : vector<64x128xf32> to vector<8x128xf32>
    %cst_16 = arith.constant dense<0.000000e+00> : vector<8x128xf32>
    %28 = tpu.matmul %25, %10, %cst_16 {dimension_numbers = #tpu.dot_dimension_numbers<[1], [0], [0], [1], [0, 0, 1, 1], [], []>} : vector<8x128xf32>, vector<128x128xf32>, vector<8x128xf32> -> vector<8x128xf32>
    %29 = arith.addf %27, %28 : vector<8x128xf32>
    %30 = math.tanh %29 : vector<8x128xf32>
    %c24 = arith.constant 24 : index
    %c0_17 = arith.constant 0 : index
    %31 = vector.load %arg7[%c24, %c0_17] : memref<64x128xf32, #tpu.memory_space<vmem>>, vector<8x128xf32>
    tpu.vector_store %arg7[%c24, %c0_17], %30 {strides = array<i32>} : memref<64x128xf32, #tpu.memory_space<vmem>>, vector<8x128xf32>,
    %32 = vector.extract_strided_slice %9 {offsets = [32, 0], sizes = [8, 128], strides = [1, 1]} : vector<64x128xf32> to vector<8x128xf32>
    %cst_18 = arith.constant dense<0.000000e+00> : vector<8x128xf32>
    %33 = tpu.matmul %30, %10, %cst_18 {dimension_numbers = #tpu.dot_dimension_numbers<[1], [0], [0], [1], [0, 0, 1, 1], [], []>} : vector<8x128xf32>, vector<128x128xf32>, vector<8x128xf32> -> vector<8x128xf32>
    %34 = arith.addf %32, %33 : vector<8x128xf32>
    %35 = math.tanh %34 : vector<8x128xf32>
    %c32 = arith.constant 32 : index
    %c0_19 = arith.constant 0 : index
    %36 = vector.load %arg7[%c32, %c0_19] : memref<64x128xf32, #tpu.memory_space<vmem>>, vector<8x128xf32>
    tpu.vector_store %arg7[%c32, %c0_19], %35 {strides = array<i32>} : memref<64x128xf32, #tpu.memory_space<vmem>>, vector<8x128xf32>,
    %37 = vector.extract_strided_slice %9 {offsets = [40, 0], sizes = [8, 128], strides = [1, 1]} : vector<64x128xf32> to vector<8x128xf32>
    %cst_20 = arith.constant dense<0.000000e+00> : vector<8x128xf32>
    %38 = tpu.matmul %35, %10, %cst_20 {dimension_numbers = #tpu.dot_dimension_numbers<[1], [0], [0], [1], [0, 0, 1, 1], [], []>} : vector<8x128xf32>, vector<128x128xf32>, vector<8x128xf32> -> vector<8x128xf32>
    %39 = arith.addf %37, %38 : vector<8x128xf32>
    %40 = math.tanh %39 : vector<8x128xf32>
    %c40 = arith.constant 40 : index
    %c0_21 = arith.constant 0 : index
    %41 = vector.load %arg7[%c40, %c0_21] : memref<64x128xf32, #tpu.memory_space<vmem>>, vector<8x128xf32>
    tpu.vector_store %arg7[%c40, %c0_21], %40 {strides = array<i32>} : memref<64x128xf32, #tpu.memory_space<vmem>>, vector<8x128xf32>,
    %42 = vector.extract_strided_slice %9 {offsets = [48, 0], sizes = [8, 128], strides = [1, 1]} : vector<64x128xf32> to vector<8x128xf32>
    %cst_22 = arith.constant dense<0.000000e+00> : vector<8x128xf32>
    %43 = tpu.matmul %40, %10, %cst_22 {dimension_numbers = #tpu.dot_dimension_numbers<[1], [0], [0], [1], [0, 0, 1, 1], [], []>} : vector<8x128xf32>, vector<128x128xf32>, vector<8x128xf32> -> vector<8x128xf32>
    %44 = arith.addf %42, %43 : vector<8x128xf32>
    %45 = math.tanh %44 : vector<8x128xf32>
    %c48 = arith.constant 48 : index
    %c0_23 = arith.constant 0 : index
    %46 = vector.load %arg7[%c48, %c0_23] : memref<64x128xf32, #tpu.memory_space<vmem>>, vector<8x128xf32>
    tpu.vector_store %arg7[%c48, %c0_23], %45 {strides = array<i32>} : memref<64x128xf32, #tpu.memory_space<vmem>>, vector<8x128xf32>,
    %47 = vector.extract_strided_slice %9 {offsets = [56, 0], sizes = [8, 128], strides = [1, 1]} : vector<64x128xf32> to vector<8x128xf32>
    %cst_24 = arith.constant dense<0.000000e+00> : vector<8x128xf32>
    %48 = tpu.matmul %45, %10, %cst_24 {dimension_numbers = #tpu.dot_dimension_numbers<[1], [0], [0], [1], [0, 0, 1, 1], [], []>} : vector<8x128xf32>, vector<128x128xf32>, vector<8x128xf32> -> vector<8x128xf32>
    %49 = arith.addf %47, %48 : vector<8x128xf32>
    %50 = math.tanh %49 : vector<8x128xf32>
    %c56 = arith.constant 56 : index
    %c0_25 = arith.constant 0 : index
    %51 = vector.load %arg7[%c56, %c0_25] : memref<64x128xf32, #tpu.memory_space<vmem>>, vector<8x128xf32>
    tpu.vector_store %arg7[%c56, %c0_25], %50 {strides = array<i32>} : memref<64x128xf32, #tpu.memory_space<vmem>>, vector<8x128xf32>,
    %c0_26 = arith.constant 0 : index
    %c0_27 = arith.constant 0 : index
    %52 = vector.load %arg7[%c0_26, %c0_27] : memref<64x128xf32, #tpu.memory_space<vmem>>, vector<64x128xf32>
    %c0_28 = arith.constant 0 : index
    %c0_29 = arith.constant 0 : index
    %53 = vector.load %arg4[%c0_28, %c0_29] : memref<128x128xf32, #tpu.memory_space<vmem>>, vector<128x128xf32>
    %cst_30 = arith.constant dense<0.000000e+00> : vector<64x128xf32>
    %54 = tpu.matmul %52, %53, %cst_30 {dimension_numbers = #tpu.dot_dimension_numbers<[1], [0], [0], [1], [0, 0, 1, 1], [], []>} : vector<64x128xf32>, vector<128x128xf32>, vector<64x128xf32> -> vector<64x128xf32>
    %c0_31 = arith.constant 0 : index
    %c0_32 = arith.constant 0 : index
    %55 = vector.load %arg5[%c0_31, %c0_32] : memref<1x128xf32, #tpu.memory_space<vmem>>, vector<1x128xf32>
    %56 = vector.broadcast %55 : vector<1x128xf32> to vector<64x128xf32>
    %57 = arith.addf %54, %56 : vector<64x128xf32>
    %58 = vector.shape_cast %57 : vector<64x128xf32> to vector<8x8x128xf32>
    %cst_33 = arith.constant dense<0xFF800000> : vector<8x128xf32>
    %59 = vector.multi_reduction <maximumf>, %58, %cst_33 [0] : vector<8x8x128xf32> to vector<8x128xf32>
    %60 = vector.shape_cast %59 : vector<8x128xf32> to vector<1x8x128xf32>
    %61 = vector.broadcast %60 : vector<1x8x128xf32> to vector<8x8x128xf32>
    %62 = arith.subf %58, %61 : vector<8x8x128xf32>
    %63 = math.exp %62 : vector<8x8x128xf32>
    %cst_34 = arith.constant dense<0.000000e+00> : vector<8x128xf32>
    %64 = vector.multi_reduction <add>, %63, %cst_34 [0] : vector<8x8x128xf32> to vector<8x128xf32>
    %65 = vector.shape_cast %64 : vector<8x128xf32> to vector<1x8x128xf32>
    %66 = tpu.reciprocal %65 : vector<1x8x128xf32> -> vector<1x8x128xf32>
    %67 = vector.broadcast %66 : vector<1x8x128xf32> to vector<8x8x128xf32>
    %68 = arith.mulf %63, %67 : vector<8x8x128xf32>
    %c0_35 = arith.constant 0 : index
    %c0_36 = arith.constant 0 : index
    %c0_37 = arith.constant 0 : index
    %69 = vector.load %arg6[%c0_35, %c0_36, %c0_37] : memref<8x8x128xf32, #tpu.memory_space<vmem>>, vector<8x8x128xf32>
    tpu.vector_store %arg6[%c0_35, %c0_36, %c0_37], %68 {strides = array<i32>} : memref<8x8x128xf32, #tpu.memory_space<vmem>>, vector<8x8x128xf32>,
    return
  }
}

</mosaic_0001>

<llo_original>
// kernel: tpu_custom_call.1
$region0: #{tpu_custom_call.1}
  #allocation0 [shape = 'u32[]', space=smem, size = 0x4, offset = 0x4, fixed_abs, tag = 'smem constant byte address 0x4 - core index']
  #allocation1 [shape = 'u32[144,128]{1,0:T(1,128)}', space=vmem, size = 0x12000, scoped, tag = 'internal scratch']
  #allocation2 [shape = 'f32[64,128]{1,0:T(8,128)}', space=vmem, size = 0x8000, scoped, tag = 'scratch operand']
  %s0 = inlined_call_operand.vmem [shape: s32[64,1], index: 0, kind: input, shape index: {}]
  %s1 = inlined_call_operand.vmem [shape: f32[128,32], index: 1, kind: input, shape index: {}]
  %s2 = inlined_call_operand.vmem [shape: f32[32,128], index: 2, kind: input, shape index: {}]
  %s3 = inlined_call_operand.vmem [shape: f32[128,128], index: 3, kind: input, shape index: {}]
  %s4 = inlined_call_operand.hbm [shape: f32[128,128], index: 4, kind: input, shape index: {}]
  %s5 = inlined_call_operand.vmem [shape: f32[1,128], index: 5, kind: input, shape index: {}]
  %s6 = inlined_call_operand.hbm [shape: f32[8,8,128], index: 6, kind: output, shape index: {}]
  %s7 = sld [smem:[#allocation0]]
  $region38: #{tpu_custom_call.1} parent=0
    _
  %s9 = ssub.s32 1, %s7
  %s10 = scalar_select 0, %s9, %s7
  $region1: #{tpu_custom_call.1} parent=0
    #allocation3 [shape = 'u8[65536]{0}', space=vmem, size = 0x10000, scoped, tag = 'input window, operand 4, single buffered']
    #allocation4 [shape = 's32[1]{0}', space=sflag, size = 0x4, scoped, tag = 'scoped memory for tpu_custom_call.1']
    #allocation5 [shape = 's32[1]{0}', space=sflag, size = 0x4, scoped, tag = 'scoped memory for tpu_custom_call.1']
    #allocation6 [shape = 'u8[32768]{0}', space=vmem, size = 0x8000, scoped, tag = 'output window, operand 0, single buffered']
    %11 = vsyncpa [#allocation4], 0
    %12 = vsyncpa [#allocation5], 0
    // Predicated region
    $region2: #{tpu_custom_call.1} parent=1 // pred_check
      _
    $region3: #{tpu_custom_call.1} parent=1 // pred_check_branch
      %14 = sbr.rel (0) target = $region5
    $region4: #{tpu_custom_call.1} parent=1 // pred_region
      _
    $region5: #{tpu_custom_call.1} parent=1 // pred_fallthru
      _
    // Predicated region
    $region6: #{tpu_custom_call.1} parent=1 // pred_check
      _
    $region7: #{tpu_custom_call.1} parent=1 // pred_check_branch
      %16 = sbr.rel (0) target = $region9
    $region8: #{tpu_custom_call.1} parent=1 // pred_region
      _
    $region9: #{tpu_custom_call.1} parent=1 // pred_fallthru
      _
    // Predicated region
    $region10: #{tpu_custom_call.1} parent=1 // pred_check
      _
    $region11: #{tpu_custom_call.1} parent=1 // pred_check_branch
      %18 = sbr.rel (0) target = $region13
    $region12: #{tpu_custom_call.1} parent=1 // pred_region
      _
    $region13: #{tpu_custom_call.1} parent=1 // pred_fallthru
      _
    // Predicated region
    $region14: #{tpu_custom_call.1} parent=1 // pred_check
      _
    $region15: #{tpu_custom_call.1} parent=1 // pred_check_branch
      %20 = sbr.rel (0) target = $region17
    $region16: #{tpu_custom_call.1} parent=1 // pred_region
      _
    $region17: #{tpu_custom_call.1} parent=1 // pred_fallthru
      _
    // Predicated region
    $region18: #{tpu_custom_call.1} parent=1 // pred_check
      _
    $region19: #{tpu_custom_call.1} parent=1 // pred_check_branch
      %22 = sbr.rel (0) target = $region21
    $region20: #{tpu_custom_call.1} parent=1 // pred_region
      %s24 = ssub.s32 2048, 2048
      %25 = vsyncadd [#allocation4], %s24
      %s26 = sshll.u32 [#allocation3], 4
      %s27 = int_to_ptr.vmem [resolvable:$true] %s26
      %32 = dma.hbm_to_vmem [thread:$0]  %s4, 2048, %s27, [#allocation4], 128, 128, 8
    $region21: #{tpu_custom_call.1} parent=1 // pred_fallthru
      _
    // Predicated region
    $region22: #{tpu_custom_call.1} parent=1 // pred_check
      _
    $region23: #{tpu_custom_call.1} parent=1 // pred_check_branch
      %34 = sbr.rel (0) target = $region25
    $region24: #{tpu_custom_call.1} parent=1 // pred_region
      _
    $region25: #{tpu_custom_call.1} parent=1 // pred_fallthru
      _
    // Predicated region
    $region26: #{tpu_custom_call.1} parent=1 // pred_check
      _
    $region27: #{tpu_custom_call.1} parent=1 // pred_check_branch
      %36 = sbr.rel (0) target = $region29
    $region28: #{tpu_custom_call.1} parent=1 // pred_region
      %37 = dma.done [#allocation4], 2048
    $region29: #{tpu_custom_call.1} parent=1 // pred_fallthru
      _
    %v38 = vld [vmem:[%s0] sm:$0xff]
    %v39 = vld [vmem:[%s0 + $0x8] sm:$0xff]
    %v40 = vld [vmem:[%s0 + $0x10] sm:$0xff]
    %v41 = vld [vmem:[%s0 + $0x18] sm:$0xff]
    %v42 = vld [vmem:[%s0 + $0x20] sm:$0xff]
    %v43 = vld [vmem:[%s0 + $0x28] sm:$0xff]
    %v44 = vld [vmem:[%s0 + $0x30] sm:$0xff]
    %v45 = vld [vmem:[%s0 + $0x38] sm:$0xff]
    %v46 = vlaneseq
    %v47 = vand.u32 %v46, 127
    %48 = vset.pattern.permute.xlu0 0
    %49 = vperm.xlu0 %48, %v38
    %v50 = vpop.permute.xlu0 %49
    %51 = vset.pattern.permute.xlu0 0
    %52 = vperm.xlu0 %51, %v39
    %v53 = vpop.permute.xlu0 %52
    %54 = vset.pattern.permute.xlu0 0
    %55 = vperm.xlu0 %54, %v40
    %v56 = vpop.permute.xlu0 %55
    %57 = vset.pattern.permute.xlu0 0
    %58 = vperm.xlu0 %57, %v41
    %v59 = vpop.permute.xlu0 %58
    %60 = vset.pattern.permute.xlu0 0
    %61 = vperm.xlu0 %60, %v42
    %v62 = vpop.permute.xlu0 %61
    %63 = vset.pattern.permute.xlu0 0
    %64 = vperm.xlu0 %63, %v43
    %v65 = vpop.permute.xlu0 %64
    %66 = vset.pattern.permute.xlu0 0
    %67 = vperm.xlu0 %66, %v44
    %v68 = vpop.permute.xlu0 %67
    %69 = vset.pattern.permute.xlu0 0
    %70 = vperm.xlu0 %69, %v45
    %v71 = vpop.permute.xlu0 %70
    %vm72 = vcmp.eq.s32.totalorder %v47, %v50
    %vm73 = vcmp.eq.s32.totalorder %v47, %v53
    %vm74 = vcmp.eq.s32.totalorder %v47, %v56
    %vm75 = vcmp.eq.s32.totalorder %v47, %v59
    %vm76 = vcmp.eq.s32.totalorder %v47, %v62
    %vm77 = vcmp.eq.s32.totalorder %v47, %v65
    %vm78 = vcmp.eq.s32.totalorder %v47, %v68
    %vm79 = vcmp.eq.s32.totalorder %v47, %v71
    %v80 = vsel %vm72, 1, 0
    %v81 = vsel %vm73, 1, 0
    %v82 = vsel %vm74, 1, 0
    %v83 = vsel %vm75, 1, 0
    %v84 = vsel %vm76, 1, 0
    %v85 = vsel %vm77, 1, 0
    %v86 = vsel %vm78, 1, 0
    %v87 = vsel %vm79, 1, 0
    %v88 = vcvt.s32.f32 %v80
    %v89 = vcvt.s32.f32 %v81
    %v90 = vcvt.s32.f32 %v82
    %v91 = vcvt.s32.f32 %v83
    %v92 = vcvt.s32.f32 %v84
    %v93 = vcvt.s32.f32 %v85
    %v94 = vcvt.s32.f32 %v86
    %v95 = vcvt.s32.f32 %v87
    %v96 = vld [vmem:[%s1] sm:$0xff]
    %v97 = vld [vmem:[%s1 + $0x8] sm:$0xff]
    %v98 = vld [vmem:[%s1 + $0x10] sm:$0xff]
    %v99 = vld [vmem:[%s1 + $0x18] sm:$0xff]
    %v100 = vld [vmem:[%s1 + $0x20] sm:$0xff]
    %v101 = vld [vmem:[%s1 + $0x28] sm:$0xff]
    %v102 = vld [vmem:[%s1 + $0x30] sm:$0xff]
    %v103 = vld [vmem:[%s1 + $0x38] sm:$0xff]
    %v104 = vld [vmem:[%s1 + $0x40] sm:$0xff]
    %v105 = vld [vmem:[%s1 + $0x48] sm:$0xff]
    %v106 = vld [vmem:[%s1 + $0x50] sm:$0xff]
    %v107 = vld [vmem:[%s1 + $0x58] sm:$0xff]
    %v108 = vld [vmem:[%s1 + $0x60] sm:$0xff]
    %v109 = vld [vmem:[%s1 + $0x68] sm:$0xff]
    %v110 = vld [vmem:[%s1 + $0x70] sm:$0xff]
    %v111 = vld [vmem:[%s1 + $0x78] sm:$0xff]
    %112 = vmatprep.subr.mxu0 0.0
    %113 = vmatpush1.msra.mxu0 %v96
    %114 = vmatprep.subr.mxu0 0.0
    %115 = vmatpush1.msra.mxu0 %v97
    %116 = vmatprep.subr.mxu0 0.0
    %117 = vmatpush1.msra.mxu0 %v98
    %118 = vmatprep.subr.mxu0 0.0
    %119 = vmatpush1.msra.mxu0 %v99
    %120 = vmatprep.subr.mxu0 0.0
    %121 = vmatpush1.msra.mxu0 %v100
    %122 = vmatprep.subr.mxu0 0.0
    %123 = vmatpush1.msra.mxu0 %v101
    %124 = vmatprep.subr.mxu0 0.0
    %125 = vmatpush1.msra.mxu0 %v102
    %126 = vmatprep.subr.mxu0 0.0
    %127 = vmatpush1.msra.mxu0 %v103
    %128 = vmatprep.subr.mxu0 0.0
    %129 = vmatpush1.msra.mxu0 %v104
    %130 = vmatprep.subr.mxu0 0.0
    %131 = vmatpush1.msra.mxu0 %v105
    %132 = vmatprep.subr.mxu0 0.0
    %133 = vmatpush1.msra.mxu0 %v106
    %134 = vmatprep.subr.mxu0 0.0
    %135 = vmatpush1.msra.mxu0 %v107
    %136 = vmatprep.subr.mxu0 0.0
    %137 = vmatpush1.msra.mxu0 %v108
    %138 = vmatprep.subr.mxu0 0.0
    %139 = vmatpush1.msra.mxu0 %v109
    %140 = vmatprep.subr.mxu0 0.0
    %141 = vmatpush1.msra.mxu0 %v110
    %142 = vmatprep.subr.mxu0 0.0
    %143 = vmatpush1.msra.mxu0 %v111
    %144 = vmatprep.subr.mxu0 0.0
    %145 = vmatpush1.msra.mxu0 0.0
    %146 = vmatprep.subr.mxu0 0.0
    %147 = vmatpush1.msra.mxu0 0.0
    %148 = vmatprep.subr.mxu0 0.0
    %149 = vmatpush1.msra.mxu0 0.0
    %150 = vmatprep.subr.mxu0 0.0
    %151 = vmatpush1.msra.mxu0 0.0
    %152 = vmatprep.subr.mxu0 0.0
    %153 = vmatpush1.msra.mxu0 0.0
    %154 = vmatprep.subr.mxu0 0.0
    %155 = vmatpush1.msra.mxu0 0.0
    %156 = vmatprep.subr.mxu0 0.0
    %157 = vmatpush1.msra.mxu0 0.0
    %158 = vmatprep.subr.mxu0 0.0
    %159 = vmatpush1.msra.mxu0 0.0
    %160 = vmatprep.subr.mxu0 0.0
    %161 = vmatpush1.msra.mxu0 0.0
    %162 = vmatprep.subr.mxu0 0.0
    %163 = vmatpush1.msra.mxu0 0.0
    %164 = vmatprep.subr.mxu0 0.0
    %165 = vmatpush1.msra.mxu0 0.0
    %166 = vmatprep.subr.mxu0 0.0
    %167 = vmatpush1.msra.mxu0 0.0
    %168 = vmatprep.subr.mxu0 0.0
    %169 = vmatpush1.msra.mxu0 0.0
    %170 = vmatprep.subr.mxu0 0.0
    %171 = vmatpush1.msra.mxu0 0.0
    %172 = vmatprep.subr.mxu0 0.0
    %173 = vmatpush1.msra.mxu0 0.0
    %174 = vmatprep.subr.mxu0 0.0
    %175 = vmatpush1.msra.mxu0 0.0
    %176 = vmatprep.mubr.f32.mxu0 0.0
    %177 = vmatmul.mubr.f32.gmra.mrb[0].mxu0 %v88
    %v178 = vpop.f32.mrb[0].mxu0
    %v179 = vadd.f32 0.0, %v178
    %v180 = vpop.f32.mrb[0].mxu0
    %181 = vmatprep.mubr.f32.mxu0 0.0
    %182 = vmatmul.mubr.f32.gmra.mrb[0].mxu0 %v89
    %v183 = vpop.f32.mrb[0].mxu0
    %v184 = vadd.f32 0.0, %v183
    %v185 = vpop.f32.mrb[0].mxu0
    %186 = vmatprep.mubr.f32.mxu0 0.0
    %187 = vmatmul.mubr.f32.gmra.mrb[0].mxu0 %v90
    %v188 = vpop.f32.mrb[0].mxu0
    %v189 = vadd.f32 0.0, %v188
    %v190 = vpop.f32.mrb[0].mxu0
    %191 = vmatprep.mubr.f32.mxu0 0.0
    %192 = vmatmul.mubr.f32.gmra.mrb[0].mxu0 %v91
    %v193 = vpop.f32.mrb[0].mxu0
    %v194 = vadd.f32 0.0, %v193
    %v195 = vpop.f32.mrb[0].mxu0
    %196 = vmatprep.mubr.f32.mxu0 0.0
    %197 = vmatmul.mubr.f32.gmra.mrb[0].mxu0 %v92
    %v198 = vpop.f32.mrb[0].mxu0
    %v199 = vadd.f32 0.0, %v198
    %v200 = vpop.f32.mrb[0].mxu0
    %201 = vmatprep.mubr.f32.mxu0 0.0
    %202 = vmatmul.mubr.f32.gmra.mrb[0].mxu0 %v93
    %v203 = vpop.f32.mrb[0].mxu0
    %v204 = vadd.f32 0.0, %v203
    %v205 = vpop.f32.mrb[0].mxu0
    %206 = vmatprep.mubr.f32.mxu0 0.0
    %207 = vmatmul.mubr.f32.gmra.mrb[0].mxu0 %v94
    %v208 = vpop.f32.mrb[0].mxu0
    %v209 = vadd.f32 0.0, %v208
    %v210 = vpop.f32.mrb[0].mxu0
    %211 = vmatprep.mubr.f32.mxu0 0.0
    %212 = vmatmul.mubr.f32.gmra.mrb[0].mxu0 %v95
    %v213 = vpop.f32.mrb[0].mxu0
    %v214 = vadd.f32 0.0, %v213
    %v215 = vpop.f32.mrb[0].mxu0
    %216 = vdwg.mxu0
    %v217 = vld [vmem:[%s2] sm:$0xff]
    %v218 = vld [vmem:[%s2 + $0x8] sm:$0xff]
    %v219 = vld [vmem:[%s2 + $0x10] sm:$0xff]
    %v220 = vld [vmem:[%s2 + $0x18] sm:$0xff]
    %vm221 = vcmask 261120
    %v223 = vsel %vm221, %v179, 0
    %v226 = vsel %vm221, %v184, 0
    %v229 = vsel %vm221, %v189, 0
    %v232 = vsel %vm221, %v194, 0
    %v235 = vsel %vm221, %v199, 0
    %v238 = vsel %vm221, %v204, 0
    %v241 = vsel %vm221, %v209, 0
    %v244 = vsel %vm221, %v214, 0
    %246 = vmatprep.subr.mxu0 0.0
    %247 = vmatpush1.msra.mxu0 %v217
    %248 = vmatprep.subr.mxu0 0.0
    %249 = vmatpush1.msra.mxu0 %v218
    %250 = vmatprep.subr.mxu0 0.0
    %251 = vmatpush1.msra.mxu0 %v219
    %252 = vmatprep.subr.mxu0 0.0
    %253 = vmatpush1.msra.mxu0 %v220
    %254 = vmatprep.subr.mxu0 0.0
    %255 = vmatpush1.msra.mxu0 0.0
    %256 = vmatprep.subr.mxu0 0.0
    %257 = vmatpush1.msra.mxu0 0.0
    %258 = vmatprep.subr.mxu0 0.0
    %259 = vmatpush1.msra.mxu0 0.0
    %260 = vmatprep.subr.mxu0 0.0
    %261 = vmatpush1.msra.mxu0 0.0
    %262 = vmatprep.subr.mxu0 0.0
    %263 = vmatpush1.msra.mxu0 0.0
    %264 = vmatprep.subr.mxu0 0.0
    %265 = vmatpush1.msra.mxu0 0.0
    %266 = vmatprep.subr.mxu0 0.0
    %267 = vmatpush1.msra.mxu0 0.0
    %268 = vmatprep.subr.mxu0 0.0
    %269 = vmatpush1.msra.mxu0 0.0
    %270 = vmatprep.subr.mxu0 0.0
    %271 = vmatpush1.msra.mxu0 0.0
    %272 = vmatprep.subr.mxu0 0.0
    %273 = vmatpush1.msra.mxu0 0.0
    %274 = vmatprep.subr.mxu0 0.0
    %275 = vmatpush1.msra.mxu0 0.0
    %276 = vmatprep.subr.mxu0 0.0
    %277 = vmatpush1.msra.mxu0 0.0
    %278 = vmatprep.subr.mxu0 0.0
    %279 = vmatpush1.msra.mxu0 0.0
    %280 = vmatprep.subr.mxu0 0.0
    %281 = vmatpush1.msra.mxu0 0.0
    %282 = vmatprep.subr.mxu0 0.0
    %283 = vmatpush1.msra.mxu0 0.0
    %284 = vmatprep.subr.mxu0 0.0
    %285 = vmatpush1.msra.mxu0 0.0
    %286 = vmatprep.subr.mxu0 0.0
    %287 = vmatpush1.msra.mxu0 0.0
    %288 = vmatprep.subr.mxu0 0.0
    %289 = vmatpush1.msra.mxu0 0.0
    %290 = vmatprep.subr.mxu0 0.0
    %291 = vmatpush1.msra.mxu0 0.0
    %292 = vmatprep.subr.mxu0 0.0
    %293 = vmatpush1.msra.mxu0 0.0
    %294 = vmatprep.subr.mxu0 0.0
    %295 = vmatpush1.msra.mxu0 0.0
    %296 = vmatprep.subr.mxu0 0.0
    %297 = vmatpush1.msra.mxu0 0.0
    %298 = vmatprep.subr.mxu0 0.0
    %299 = vmatpush1.msra.mxu0 0.0
    %300 = vmatprep.subr.mxu0 0.0
    %301 = vmatpush1.msra.mxu0 0.0
    %302 = vmatprep.subr.mxu0 0.0
    %303 = vmatpush1.msra.mxu0 0.0
    %304 = vmatprep.subr.mxu0 0.0
    %305 = vmatpush1.msra.mxu0 0.0
    %306 = vmatprep.subr.mxu0 0.0
    %307 = vmatpush1.msra.mxu0 0.0
    %308 = vmatprep.subr.mxu0 0.0
    %309 = vmatpush1.msra.mxu0 0.0
    %310 = vmatprep.mubr.f32.mxu0 0.0
    %311 = vmatmul.mubr.f32.gmra.mrb[0].mxu0 %v223
    %v312 = vpop.f32.mrb[0].mxu0
    %v313 = vadd.f32 0.0, %v312
    %v314 = vpop.f32.mrb[0].mxu0
    %315 = vmatprep.mubr.f32.mxu0 0.0
    %316 = vmatmul.mubr.f32.gmra.mrb[0].mxu0 %v226
    %v317 = vpop.f32.mrb[0].mxu0
    %v318 = vadd.f32 0.0, %v317
    %v319 = vpop.f32.mrb[0].mxu0
    %320 = vmatprep.mubr.f32.mxu0 0.0
    %321 = vmatmul.mubr.f32.gmra.mrb[0].mxu0 %v229
    %v322 = vpop.f32.mrb[0].mxu0
    %v323 = vadd.f32 0.0, %v322
    %v324 = vpop.f32.mrb[0].mxu0
    %325 = vmatprep.mubr.f32.mxu0 0.0
    %326 = vmatmul.mubr.f32.gmra.mrb[0].mxu0 %v232
    %v327 = vpop.f32.mrb[0].mxu0
    %v328 = vadd.f32 0.0, %v327
    %v329 = vpop.f32.mrb[0].mxu0
    %330 = vmatprep.mubr.f32.mxu0 0.0
    %331 = vmatmul.mubr.f32.gmra.mrb[0].mxu0 %v235
    %v332 = vpop.f32.mrb[0].mxu0
    %v333 = vadd.f32 0.0, %v332
    %v334 = vpop.f32.mrb[0].mxu0
    %335 = vmatprep.mubr.f32.mxu0 0.0
    %336 = vmatmul.mubr.f32.gmra.mrb[0].mxu0 %v238
    %v337 = vpop.f32.mrb[0].mxu0
    %v338 = vadd.f32 0.0, %v337
    %v339 = vpop.f32.mrb[0].mxu0
    %340 = vmatprep.mubr.f32.mxu0 0.0
    %341 = vmatmul.mubr.f32.gmra.mrb[0].mxu0 %v241
    %v342 = vpop.f32.mrb[0].mxu0
    %v343 = vadd.f32 0.0, %v342
    %v344 = vpop.f32.mrb[0].mxu0
    %345 = vmatprep.mubr.f32.mxu0 0.0
    %346 = vmatmul.mubr.f32.gmra.mrb[0].mxu0 %v244
    %v347 = vpop.f32.mrb[0].mxu0
    %v348 = vadd.f32 0.0, %v347
    %v349 = vpop.f32.mrb[0].mxu0
    %350 = vdwg.mxu0
    %v351 = vld [vmem:[%s3] sm:$0xff]
    %v352 = vld [vmem:[%s3 + $0x8] sm:$0xff]
    %v353 = vld [vmem:[%s3 + $0x10] sm:$0xff]
    %v354 = vld [vmem:[%s3 + $0x18] sm:$0xff]
    %v355 = vld [vmem:[%s3 + $0x20] sm:$0xff]
    %v356 = vld [vmem:[%s3 + $0x28] sm:$0xff]
    %v357 = vld [vmem:[%s3 + $0x30] sm:$0xff]
    %v358 = vld [vmem:[%s3 + $0x38] sm:$0xff]
    %v359 = vld [vmem:[%s3 + $0x40] sm:$0xff]
    %v360 = vld [vmem:[%s3 + $0x48] sm:$0xff]
    %v361 = vld [vmem:[%s3 + $0x50] sm:$0xff]
    %v362 = vld [vmem:[%s3 + $0x58] sm:$0xff]
    %v363 = vld [vmem:[%s3 + $0x60] sm:$0xff]
    %v364 = vld [vmem:[%s3 + $0x68] sm:$0xff]
    %v365 = vld [vmem:[%s3 + $0x70] sm:$0xff]
    %v366 = vld [vmem:[%s3 + $0x78] sm:$0xff]
    %367 = vmatprep.subr.mxu0 0.0
    %368 = vmatpush1.msra.mxu0 %v351
    %369 = vmatprep.subr.mxu0 0.0
    %370 = vmatpush1.msra.mxu0 %v352
    %371 = vmatprep.subr.mxu0 0.0
    %372 = vmatpush1.msra.mxu0 %v353
    %373 = vmatprep.subr.mxu0 0.0
    %374 = vmatpush1.msra.mxu0 %v354
    %375 = vmatprep.subr.mxu0 0.0
    %376 = vmatpush1.msra.mxu0 %v355
    %377 = vmatprep.subr.mxu0 0.0
    %378 = vmatpush1.msra.mxu0 %v356
    %379 = vmatprep.subr.mxu0 0.0
    %380 = vmatpush1.msra.mxu0 %v357
    %381 = vmatprep.subr.mxu0 0.0
    %382 = vmatpush1.msra.mxu0 %v358
    %383 = vmatprep.subr.mxu0 0.0
    %384 = vmatpush1.msra.mxu0 %v359
    %385 = vmatprep.subr.mxu0 0.0
    %386 = vmatpush1.msra.mxu0 %v360
    %387 = vmatprep.subr.mxu0 0.0
    %388 = vmatpush1.msra.mxu0 %v361
    %389 = vmatprep.subr.mxu0 0.0
    %390 = vmatpush1.msra.mxu0 %v362
    %391 = vmatprep.subr.mxu0 0.0
    %392 = vmatpush1.msra.mxu0 %v363
    %393 = vmatprep.subr.mxu0 0.0
    %394 = vmatpush1.msra.mxu0 %v364
    %395 = vmatprep.subr.mxu0 0.0
    %396 = vmatpush1.msra.mxu0 %v365
    %397 = vmatprep.subr.mxu0 0.0
    %398 = vmatpush1.msra.mxu0 %v366
    %399 = vmatprep.subr.mxu0 0.0
    %400 = vmatpush1.msra.mxu0 0.0
    %401 = vmatprep.subr.mxu0 0.0
    %402 = vmatpush1.msra.mxu0 0.0
    %403 = vmatprep.subr.mxu0 0.0
    %404 = vmatpush1.msra.mxu0 0.0
    %405 = vmatprep.subr.mxu0 0.0
    %406 = vmatpush1.msra.mxu0 0.0
    %407 = vmatprep.subr.mxu0 0.0
    %408 = vmatpush1.msra.mxu0 0.0
    %409 = vmatprep.subr.mxu0 0.0
    %410 = vmatpush1.msra.mxu0 0.0
    %411 = vmatprep.subr.mxu0 0.0
    %412 = vmatpush1.msra.mxu0 0.0
    %413 = vmatprep.subr.mxu0 0.0
    %414 = vmatpush1.msra.mxu0 0.0
    %415 = vmatprep.subr.mxu0 0.0
    %416 = vmatpush1.msra.mxu0 0.0
    %417 = vmatprep.subr.mxu0 0.0
    %418 = vmatpush1.msra.mxu0 0.0
    %419 = vmatprep.subr.mxu0 0.0
    %420 = vmatpush1.msra.mxu0 0.0
    %421 = vmatprep.subr.mxu0 0.0
    %422 = vmatpush1.msra.mxu0 0.0
    %423 = vmatprep.subr.mxu0 0.0
    %424 = vmatpush1.msra.mxu0 0.0
    %425 = vmatprep.subr.mxu0 0.0
    %426 = vmatpush1.msra.mxu0 0.0
    %427 = vmatprep.subr.mxu0 0.0
    %428 = vmatpush1.msra.mxu0 0.0
    %429 = vmatprep.subr.mxu0 0.0
    %430 = vmatpush1.msra.mxu0 0.0
    %431 = vmatprep.mubr.f32.mxu0 0.0
    %432 = vmatmul.mubr.f32.gmra.mrb[0].mxu0 0.0
    %v433 = vpop.f32.mrb[0].mxu0
    %v434 = vadd.f32 0.0, %v433
    %v435 = vpop.f32.mrb[0].mxu0
    %436 = vdwg.mxu0
    %v437 = vadd.f32 %v313, %v434
    %v438 = vtanh.pop %v437
    %439 = vst [vmem:[#allocation2] sm:$0xff] %v438
    %440 = vmatprep.subr.mxu0 0.0
    %441 = vmatpush1.msra.mxu0 %v351
    %442 = vmatprep.subr.mxu0 0.0
    %443 = vmatpush1.msra.mxu0 %v352
    %444 = vmatprep.subr.mxu0 0.0
    %445 = vmatpush1.msra.mxu0 %v353
    %446 = vmatprep.subr.mxu0 0.0
    %447 = vmatpush1.msra.mxu0 %v354
    %448 = vmatprep.subr.mxu0 0.0
    %449 = vmatpush1.msra.mxu0 %v355
    %450 = vmatprep.subr.mxu0 0.0
    %451 = vmatpush1.msra.mxu0 %v356
    %452 = vmatprep.subr.mxu0 0.0
    %453 = vmatpush1.msra.mxu0 %v357
    %454 = vmatprep.subr.mxu0 0.0
    %455 = vmatpush1.msra.mxu0 %v358
    %456 = vmatprep.subr.mxu0 0.0
    %457 = vmatpush1.msra.mxu0 %v359
    %458 = vmatprep.subr.mxu0 0.0
    %459 = vmatpush1.msra.mxu0 %v360
    %460 = vmatprep.subr.mxu0 0.0
    %461 = vmatpush1.msra.mxu0 %v361
    %462 = vmatprep.subr.mxu0 0.0
    %463 = vmatpush1.msra.mxu0 %v362
    %464 = vmatprep.subr.mxu0 0.0
    %465 = vmatpush1.msra.mxu0 %v363
    %466 = vmatprep.subr.mxu0 0.0
    %467 = vmatpush1.msra.mxu0 %v364
    %468 = vmatprep.subr.mxu0 0.0
    %469 = vmatpush1.msra.mxu0 %v365
    %470 = vmatprep.subr.mxu0 0.0
    %471 = vmatpush1.msra.mxu0 %v366
    %472 = vmatprep.subr.mxu0 0.0
    %473 = vmatpush1.msra.mxu0 0.0
    %474 = vmatprep.subr.mxu0 0.0
    %475 = vmatpush1.msra.mxu0 0.0
    %476 = vmatprep.subr.mxu0 0.0
    %477 = vmatpush1.msra.mxu0 0.0
    %478 = vmatprep.subr.mxu0 0.0
    %479 = vmatpush1.msra.mxu0 0.0
    %480 = vmatprep.subr.mxu0 0.0
    %481 = vmatpush1.msra.mxu0 0.0
    %482 = vmatprep.subr.mxu0 0.0
    %483 = vmatpush1.msra.mxu0 0.0
    %484 = vmatprep.subr.mxu0 0.0
    %485 = vmatpush1.msra.mxu0 0.0
    %486 = vmatprep.subr.mxu0 0.0
    %487 = vmatpush1.msra.mxu0 0.0
    %488 = vmatprep.subr.mxu0 0.0
    %489 = vmatpush1.msra.mxu0 0.0
    %490 = vmatprep.subr.mxu0 0.0
    %491 = vmatpush1.msra.mxu0 0.0
    %492 = vmatprep.subr.mxu0 0.0
    %493 = vmatpush1.msra.mxu0 0.0
    %494 = vmatprep.subr.mxu0 0.0
    %495 = vmatpush1.msra.mxu0 0.0
    %496 = vmatprep.subr.mxu0 0.0
    %497 = vmatpush1.msra.mxu0 0.0
    %498 = vmatprep.subr.mxu0 0.0
    %499 = vmatpush1.msra.mxu0 0.0
    %500 = vmatprep.subr.mxu0 0.0
    %501 = vmatpush1.msra.mxu0 0.0
    %502 = vmatprep.subr.mxu0 0.0
    %503 = vmatpush1.msra.mxu0 0.0
    %504 = vmatprep.mubr.f32.mxu0 0.0
    %505 = vmatmul.mubr.f32.gmra.mrb[0].mxu0 %v438
    %v506 = vpop.f32.mrb[0].mxu0
    %v507 = vadd.f32 0.0, %v506
    %v508 = vpop.f32.mrb[0].mxu0
    %509 = vdwg.mxu0
    %v510 = vadd.f32 %v318, %v507
    %v511 = vtanh.pop %v510
    %512 = vst [vmem:[#allocation2 + $0x8] sm:$0xff] %v511
    %513 = vmatprep.subr.mxu0 0.0
    %514 = vmatpush1.msra.mxu0 %v351
    %515 = vmatprep.subr.mxu0 0.0
    %516 = vmatpush1.msra.mxu0 %v352
    %517 = vmatprep.subr.mxu0 0.0
    %518 = vmatpush1.msra.mxu0 %v353
    %519 = vmatprep.subr.mxu0 0.0
    %520 = vmatpush1.msra.mxu0 %v354
    %521 = vmatprep.subr.mxu0 0.0
    %522 = vmatpush1.msra.mxu0 %v355
    %523 = vmatprep.subr.mxu0 0.0
    %524 = vmatpush1.msra.mxu0 %v356
    %525 = vmatprep.subr.mxu0 0.0
    %526 = vmatpush1.msra.mxu0 %v357
    %527 = vmatprep.subr.mxu0 0.0
    %528 = vmatpush1.msra.mxu0 %v358
    %529 = vmatprep.subr.mxu0 0.0
    %530 = vmatpush1.msra.mxu0 %v359
    %531 = vmatprep.subr.mxu0 0.0
    %532 = vmatpush1.msra.mxu0 %v360
    %533 = vmatprep.subr.mxu0 0.0
    %534 = vmatpush1.msra.mxu0 %v361
    %535 = vmatprep.subr.mxu0 0.0
    %536 = vmatpush1.msra.mxu0 %v362
    %537 = vmatprep.subr.mxu0 0.0
    %538 = vmatpush1.msra.mxu0 %v363
    %539 = vmatprep.subr.mxu0 0.0
    %540 = vmatpush1.msra.mxu0 %v364
    %541 = vmatprep.subr.mxu0 0.0
    %542 = vmatpush1.msra.mxu0 %v365
    %543 = vmatprep.subr.mxu0 0.0
    %544 = vmatpush1.msra.mxu0 %v366
    %545 = vmatprep.subr.mxu0 0.0
    %546 = vmatpush1.msra.mxu0 0.0
    %547 = vmatprep.subr.mxu0 0.0
    %548 = vmatpush1.msra.mxu0 0.0
    %549 = vmatprep.subr.mxu0 0.0
    %550 = vmatpush1.msra.mxu0 0.0
    %551 = vmatprep.subr.mxu0 0.0
    %552 = vmatpush1.msra.mxu0 0.0
    %553 = vmatprep.subr.mxu0 0.0
    %554 = vmatpush1.msra.mxu0 0.0
    %555 = vmatprep.subr.mxu0 0.0
    %556 = vmatpush1.msra.mxu0 0.0
    %557 = vmatprep.subr.mxu0 0.0
    %558 = vmatpush1.msra.mxu0 0.0
    %559 = vmatprep.subr.mxu0 0.0
    %560 = vmatpush1.msra.mxu0 0.0
    %561 = vmatprep.subr.mxu0 0.0
    %562 = vmatpush1.msra.mxu0 0.0
    %563 = vmatprep.subr.mxu0 0.0
    %564 = vmatpush1.msra.mxu0 0.0
    %565 = vmatprep.subr.mxu0 0.0
    %566 = vmatpush1.msra.mxu0 0.0
    %567 = vmatprep.subr.mxu0 0.0
    %568 = vmatpush1.msra.mxu0 0.0
    %569 = vmatprep.subr.mxu0 0.0
    %570 = vmatpush1.msra.mxu0 0.0
    %571 = vmatprep.subr.mxu0 0.0
    %572 = vmatpush1.msra.mxu0 0.0
    %573 = vmatprep.subr.mxu0 0.0
    %574 = vmatpush1.msra.mxu0 0.0
    %575 = vmatprep.subr.mxu0 0.0
    %576 = vmatpush1.msra.mxu0 0.0
    %577 = vmatprep.mubr.f32.mxu0 0.0
    %578 = vmatmul.mubr.f32.gmra.mrb[0].mxu0 %v511
    %v579 = vpop.f32.mrb[0].mxu0
    %v580 = vadd.f32 0.0, %v579
    %v581 = vpop.f32.mrb[0].mxu0
    %582 = vdwg.mxu0
    %v583 = vadd.f32 %v323, %v580
    %v584 = vtanh.pop %v583
    %585 = vst [vmem:[#allocation2 + $0x10] sm:$0xff] %v584
    %586 = vmatprep.subr.mxu0 0.0
    %587 = vmatpush1.msra.mxu0 %v351
    %588 = vmatprep.subr.mxu0 0.0
    %589 = vmatpush1.msra.mxu0 %v352
    %590 = vmatprep.subr.mxu0 0.0
    %591 = vmatpush1.msra.mxu0 %v353
    %592 = vmatprep.subr.mxu0 0.0
    %593 = vmatpush1.msra.mxu0 %v354
    %594 = vmatprep.subr.mxu0 0.0
    %595 = vmatpush1.msra.mxu0 %v355
    %596 = vmatprep.subr.mxu0 0.0
    %597 = vmatpush1.msra.mxu0 %v356
    %598 = vmatprep.subr.mxu0 0.0
    %599 = vmatpush1.msra.mxu0 %v357
    %600 = vmatprep.subr.mxu0 0.0
    %601 = vmatpush1.msra.mxu0 %v358
    %602 = vmatprep.subr.mxu0 0.0
    %603 = vmatpush1.msra.mxu0 %v359
    %604 = vmatprep.subr.mxu0 0.0
    %605 = vmatpush1.msra.mxu0 %v360
    %606 = vmatprep.subr.mxu0 0.0
    %607 = vmatpush1.msra.mxu0 %v361
    %608 = vmatprep.subr.mxu0 0.0
    %609 = vmatpush1.msra.mxu0 %v362
    %610 = vmatprep.subr.mxu0 0.0
    %611 = vmatpush1.msra.mxu0 %v363
    %612 = vmatprep.subr.mxu0 0.0
    %613 = vmatpush1.msra.mxu0 %v364
    %614 = vmatprep.subr.mxu0 0.0
    %615 = vmatpush1.msra.mxu0 %v365
    %616 = vmatprep.subr.mxu0 0.0
    %617 = vmatpush1.msra.mxu0 %v366
    %618 = vmatprep.subr.mxu0 0.0
    %619 = vmatpush1.msra.mxu0 0.0
    %620 = vmatprep.subr.mxu0 0.0
    %621 = vmatpush1.msra.mxu0 0.0
    %622 = vmatprep.subr.mxu0 0.0
    %623 = vmatpush1.msra.mxu0 0.0
    %624 = vmatprep.subr.mxu0 0.0
    %625 = vmatpush1.msra.mxu0 0.0
    %626 = vmatprep.subr.mxu0 0.0
    %627 = vmatpush1.msra.mxu0 0.0
    %628 = vmatprep.subr.mxu0 0.0
    %629 = vmatpush1.msra.mxu0 0.0
    %630 = vmatprep.subr.mxu0 0.0
    %631 = vmatpush1.msra.mxu0 0.0
    %632 = vmatprep.subr.mxu0 0.0
    %633 = vmatpush1.msra.mxu0 0.0
    %634 = vmatprep.subr.mxu0 0.0
    %635 = vmatpush1.msra.mxu0 0.0
    %636 = vmatprep.subr.mxu0 0.0
    %637 = vmatpush1.msra.mxu0 0.0
    %638 = vmatprep.subr.mxu0 0.0
    %639 = vmatpush1.msra.mxu0 0.0
    %640 = vmatprep.subr.mxu0 0.0
    %641 = vmatpush1.msra.mxu0 0.0
    %642 = vmatprep.subr.mxu0 0.0
    %643 = vmatpush1.msra.mxu0 0.0
    %644 = vmatprep.subr.mxu0 0.0
    %645 = vmatpush1.msra.mxu0 0.0
    %646 = vmatprep.subr.mxu0 0.0
    %647 = vmatpush1.msra.mxu0 0.0
    %648 = vmatprep.subr.mxu0 0.0
    %649 = vmatpush1.msra.mxu0 0.0
    %650 = vmatprep.mubr.f32.mxu0 0.0
    %651 = vmatmul.mubr.f32.gmra.mrb[0].mxu0 %v584
    %v652 = vpop.f32.mrb[0].mxu0
    %v653 = vadd.f32 0.0, %v652
    %v654 = vpop.f32.mrb[0].mxu0
    %655 = vdwg.mxu0
    %v656 = vadd.f32 %v328, %v653
    %v657 = vtanh.pop %v656
    %658 = vst [vmem:[#allocation2 + $0x18] sm:$0xff] %v657
    %659 = vmatprep.subr.mxu0 0.0
    %660 = vmatpush1.msra.mxu0 %v351
    %661 = vmatprep.subr.mxu0 0.0
    %662 = vmatpush1.msra.mxu0 %v352
    %663 = vmatprep.subr.mxu0 0.0
    %664 = vmatpush1.msra.mxu0 %v353
    %665 = vmatprep.subr.mxu0 0.0
    %666 = vmatpush1.msra.mxu0 %v354
    %667 = vmatprep.subr.mxu0 0.0
    %668 = vmatpush1.msra.mxu0 %v355
    %669 = vmatprep.subr.mxu0 0.0
    %670 = vmatpush1.msra.mxu0 %v356
    %671 = vmatprep.subr.mxu0 0.0
    %672 = vmatpush1.msra.mxu0 %v357
    %673 = vmatprep.subr.mxu0 0.0
    %674 = vmatpush1.msra.mxu0 %v358
    %675 = vmatprep.subr.mxu0 0.0
    %676 = vmatpush1.msra.mxu0 %v359
    %677 = vmatprep.subr.mxu0 0.0
    %678 = vmatpush1.msra.mxu0 %v360
    %679 = vmatprep.subr.mxu0 0.0
    %680 = vmatpush1.msra.mxu0 %v361
    %681 = vmatprep.subr.mxu0 0.0
    %682 = vmatpush1.msra.mxu0 %v362
    %683 = vmatprep.subr.mxu0 0.0
    %684 = vmatpush1.msra.mxu0 %v363
    %685 = vmatprep.subr.mxu0 0.0
    %686 = vmatpush1.msra.mxu0 %v364
    %687 = vmatprep.subr.mxu0 0.0
    %688 = vmatpush1.msra.mxu0 %v365
    %689 = vmatprep.subr.mxu0 0.0
    %690 = vmatpush1.msra.mxu0 %v366
    %691 = vmatprep.subr.mxu0 0.0
    %692 = vmatpush1.msra.mxu0 0.0
    %693 = vmatprep.subr.mxu0 0.0
    %694 = vmatpush1.msra.mxu0 0.0
    %695 = vmatprep.subr.mxu0 0.0
    %696 = vmatpush1.msra.mxu0 0.0
    %697 = vmatprep.subr.mxu0 0.0
    %698 = vmatpush1.msra.mxu0 0.0
    %699 = vmatprep.subr.mxu0 0.0
    %700 = vmatpush1.msra.mxu0 0.0
    %701 = vmatprep.subr.mxu0 0.0
    %702 = vmatpush1.msra.mxu0 0.0
    %703 = vmatprep.subr.mxu0 0.0
    %704 = vmatpush1.msra.mxu0 0.0
    %705 = vmatprep.subr.mxu0 0.0
    %706 = vmatpush1.msra.mxu0 0.0
    %707 = vmatprep.subr.mxu0 0.0
    %708 = vmatpush1.msra.mxu0 0.0
    %709 = vmatprep.subr.mxu0 0.0
    %710 = vmatpush1.msra.mxu0 0.0
    %711 = vmatprep.subr.mxu0 0.0
    %712 = vmatpush1.msra.mxu0 0.0
    %713 = vmatprep.subr.mxu0 0.0
    %714 = vmatpush1.msra.mxu0 0.0
    %715 = vmatprep.subr.mxu0 0.0
    %716 = vmatpush1.msra.mxu0 0.0
    %717 = vmatprep.subr.mxu0 0.0
    %718 = vmatpush1.msra.mxu0 0.0
    %719 = vmatprep.subr.mxu0 0.0
    %720 = vmatpush1.msra.mxu0 0.0
    %721 = vmatprep.subr.mxu0 0.0
    %722 = vmatpush1.msra.mxu0 0.0
    %723 = vmatprep.mubr.f32.mxu0 0.0
    %724 = vmatmul.mubr.f32.gmra.mrb[0].mxu0 %v657
    %v725 = vpop.f32.mrb[0].mxu0
    %v726 = vadd.f32 0.0, %v725
    %v727 = vpop.f32.mrb[0].mxu0
    %728 = vdwg.mxu0
    %v729 = vadd.f32 %v333, %v726
    %v730 = vtanh.pop %v729
    %731 = vst [vmem:[#allocation2 + $0x20] sm:$0xff] %v730
    %732 = vmatprep.subr.mxu0 0.0
    %733 = vmatpush1.msra.mxu0 %v351
    %734 = vmatprep.subr.mxu0 0.0
    %735 = vmatpush1.msra.mxu0 %v352
    %736 = vmatprep.subr.mxu0 0.0
    %737 = vmatpush1.msra.mxu0 %v353
    %738 = vmatprep.subr.mxu0 0.0
    %739 = vmatpush1.msra.mxu0 %v354
    %740 = vmatprep.subr.mxu0 0.0
    %741 = vmatpush1.msra.mxu0 %v355
    %742 = vmatprep.subr.mxu0 0.0
    %743 = vmatpush1.msra.mxu0 %v356
    %744 = vmatprep.subr.mxu0 0.0
    %745 = vmatpush1.msra.mxu0 %v357
    %746 = vmatprep.subr.mxu0 0.0
    %747 = vmatpush1.msra.mxu0 %v358
    %748 = vmatprep.subr.mxu0 0.0
    %749 = vmatpush1.msra.mxu0 %v359
    %750 = vmatprep.subr.mxu0 0.0
    %751 = vmatpush1.msra.mxu0 %v360
    %752 = vmatprep.subr.mxu0 0.0
    %753 = vmatpush1.msra.mxu0 %v361
    %754 = vmatprep.subr.mxu0 0.0
    %755 = vmatpush1.msra.mxu0 %v362
    %756 = vmatprep.subr.mxu0 0.0
    %757 = vmatpush1.msra.mxu0 %v363
    %758 = vmatprep.subr.mxu0 0.0
    %759 = vmatpush1.msra.mxu0 %v364
    %760 = vmatprep.subr.mxu0 0.0
    %761 = vmatpush1.msra.mxu0 %v365
    %762 = vmatprep.subr.mxu0 0.0
    %763 = vmatpush1.msra.mxu0 %v366
    %764 = vmatprep.subr.mxu0 0.0
    %765 = vmatpush1.msra.mxu0 0.0
    %766 = vmatprep.subr.mxu0 0.0
    %767 = vmatpush1.msra.mxu0 0.0
    %768 = vmatprep.subr.mxu0 0.0
    %769 = vmatpush1.msra.mxu0 0.0
    %770 = vmatprep.subr.mxu0 0.0
    %771 = vmatpush1.msra.mxu0 0.0
    %772 = vmatprep.subr.mxu0 0.0
    %773 = vmatpush1.msra.mxu0 0.0
    %774 = vmatprep.subr.mxu0 0.0
    %775 = vmatpush1.msra.mxu0 0.0
    %776 = vmatprep.subr.mxu0 0.0
    %777 = vmatpush1.msra.mxu0 0.0
    %778 = vmatprep.subr.mxu0 0.0
    %779 = vmatpush1.msra.mxu0 0.0
    %780 = vmatprep.subr.mxu0 0.0
    %781 = vmatpush1.msra.mxu0 0.0
    %782 = vmatprep.subr.mxu0 0.0
    %783 = vmatpush1.msra.mxu0 0.0
    %784 = vmatprep.subr.mxu0 0.0
    %785 = vmatpush1.msra.mxu0 0.0
    %786 = vmatprep.subr.mxu0 0.0
    %787 = vmatpush1.msra.mxu0 0.0
    %788 = vmatprep.subr.mxu0 0.0
    %789 = vmatpush1.msra.mxu0 0.0
    %790 = vmatprep.subr.mxu0 0.0
    %791 = vmatpush1.msra.mxu0 0.0
    %792 = vmatprep.subr.mxu0 0.0
    %793 = vmatpush1.msra.mxu0 0.0
    %794 = vmatprep.subr.mxu0 0.0
    %795 = vmatpush1.msra.mxu0 0.0
    %796 = vmatprep.mubr.f32.mxu0 0.0
    %797 = vmatmul.mubr.f32.gmra.mrb[0].mxu0 %v730
    %v798 = vpop.f32.mrb[0].mxu0
    %v799 = vadd.f32 0.0, %v798
    %v800 = vpop.f32.mrb[0].mxu0
    %801 = vdwg.mxu0
    %v802 = vadd.f32 %v338, %v799
    %v803 = vtanh.pop %v802
    %804 = vst [vmem:[#allocation2 + $0x28] sm:$0xff] %v803
    %805 = vmatprep.subr.mxu0 0.0
    %806 = vmatpush1.msra.mxu0 %v351
    %807 = vmatprep.subr.mxu0 0.0
    %808 = vmatpush1.msra.mxu0 %v352
    %809 = vmatprep.subr.mxu0 0.0
    %810 = vmatpush1.msra.mxu0 %v353
    %811 = vmatprep.subr.mxu0 0.0
    %812 = vmatpush1.msra.mxu0 %v354
    %813 = vmatprep.subr.mxu0 0.0
    %814 = vmatpush1.msra.mxu0 %v355
    %815 = vmatprep.subr.mxu0 0.0
    %816 = vmatpush1.msra.mxu0 %v356
    %817 = vmatprep.subr.mxu0 0.0
    %818 = vmatpush1.msra.mxu0 %v357
    %819 = vmatprep.subr.mxu0 0.0
    %820 = vmatpush1.msra.mxu0 %v358
    %821 = vmatprep.subr.mxu0 0.0
    %822 = vmatpush1.msra.mxu0 %v359
    %823 = vmatprep.subr.mxu0 0.0
    %824 = vmatpush1.msra.mxu0 %v360
    %825 = vmatprep.subr.mxu0 0.0
    %826 = vmatpush1.msra.mxu0 %v361
    %827 = vmatprep.subr.mxu0 0.0
    %828 = vmatpush1.msra.mxu0 %v362
    %829 = vmatprep.subr.mxu0 0.0
    %830 = vmatpush1.msra.mxu0 %v363
    %831 = vmatprep.subr.mxu0 0.0
    %832 = vmatpush1.msra.mxu0 %v364
    %833 = vmatprep.subr.mxu0 0.0
    %834 = vmatpush1.msra.mxu0 %v365
    %835 = vmatprep.subr.mxu0 0.0
    %836 = vmatpush1.msra.mxu0 %v366
    %837 = vmatprep.subr.mxu0 0.0
    %838 = vmatpush1.msra.mxu0 0.0
    %839 = vmatprep.subr.mxu0 0.0
    %840 = vmatpush1.msra.mxu0 0.0
    %841 = vmatprep.subr.mxu0 0.0
    %842 = vmatpush1.msra.mxu0 0.0
    %843 = vmatprep.subr.mxu0 0.0
    %844 = vmatpush1.msra.mxu0 0.0
    %845 = vmatprep.subr.mxu0 0.0
    %846 = vmatpush1.msra.mxu0 0.0
    %847 = vmatprep.subr.mxu0 0.0
    %848 = vmatpush1.msra.mxu0 0.0
    %849 = vmatprep.subr.mxu0 0.0
    %850 = vmatpush1.msra.mxu0 0.0
    %851 = vmatprep.subr.mxu0 0.0
    %852 = vmatpush1.msra.mxu0 0.0
    %853 = vmatprep.subr.mxu0 0.0
    %854 = vmatpush1.msra.mxu0 0.0
    %855 = vmatprep.subr.mxu0 0.0
    %856 = vmatpush1.msra.mxu0 0.0
    %857 = vmatprep.subr.mxu0 0.0
    %858 = vmatpush1.msra.mxu0 0.0
    %859 = vmatprep.subr.mxu0 0.0
    %860 = vmatpush1.msra.mxu0 0.0
    %861 = vmatprep.subr.mxu0 0.0
    %862 = vmatpush1.msra.mxu0 0.0
    %863 = vmatprep.subr.mxu0 0.0
    %864 = vmatpush1.msra.mxu0 0.0
    %865 = vmatprep.subr.mxu0 0.0
    %866 = vmatpush1.msra.mxu0 0.0
    %867 = vmatprep.subr.mxu0 0.0
    %868 = vmatpush1.msra.mxu0 0.0
    %869 = vmatprep.mubr.f32.mxu0 0.0
    %870 = vmatmul.mubr.f32.gmra.mrb[0].mxu0 %v803
    %v871 = vpop.f32.mrb[0].mxu0
    %v872 = vadd.f32 0.0, %v871
    %v873 = vpop.f32.mrb[0].mxu0
    %874 = vdwg.mxu0
    %v875 = vadd.f32 %v343, %v872
    %v876 = vtanh.pop %v875
    %877 = vst [vmem:[#allocation2 + $0x30] sm:$0xff] %v876
    %878 = vmatprep.subr.mxu0 0.0
    %879 = vmatpush1.msra.mxu0 %v351
    %880 = vmatprep.subr.mxu0 0.0
    %881 = vmatpush1.msra.mxu0 %v352
    %882 = vmatprep.subr.mxu0 0.0
    %883 = vmatpush1.msra.mxu0 %v353
    %884 = vmatprep.subr.mxu0 0.0
    %885 = vmatpush1.msra.mxu0 %v354
    %886 = vmatprep.subr.mxu0 0.0
    %887 = vmatpush1.msra.mxu0 %v355
    %888 = vmatprep.subr.mxu0 0.0
    %889 = vmatpush1.msra.mxu0 %v356
    %890 = vmatprep.subr.mxu0 0.0
    %891 = vmatpush1.msra.mxu0 %v357
    %892 = vmatprep.subr.mxu0 0.0
    %893 = vmatpush1.msra.mxu0 %v358
    %894 = vmatprep.subr.mxu0 0.0
    %895 = vmatpush1.msra.mxu0 %v359
    %896 = vmatprep.subr.mxu0 0.0
    %897 = vmatpush1.msra.mxu0 %v360
    %898 = vmatprep.subr.mxu0 0.0
    %899 = vmatpush1.msra.mxu0 %v361
    %900 = vmatprep.subr.mxu0 0.0
    %901 = vmatpush1.msra.mxu0 %v362
    %902 = vmatprep.subr.mxu0 0.0
    %903 = vmatpush1.msra.mxu0 %v363
    %904 = vmatprep.subr.mxu0 0.0
    %905 = vmatpush1.msra.mxu0 %v364
    %906 = vmatprep.subr.mxu0 0.0
    %907 = vmatpush1.msra.mxu0 %v365
    %908 = vmatprep.subr.mxu0 0.0
    %909 = vmatpush1.msra.mxu0 %v366
    %910 = vmatprep.subr.mxu0 0.0
    %911 = vmatpush1.msra.mxu0 0.0
    %912 = vmatprep.subr.mxu0 0.0
    %913 = vmatpush1.msra.mxu0 0.0
    %914 = vmatprep.subr.mxu0 0.0
    %915 = vmatpush1.msra.mxu0 0.0
    %916 = vmatprep.subr.mxu0 0.0
    %917 = vmatpush1.msra.mxu0 0.0
    %918 = vmatprep.subr.mxu0 0.0
    %919 = vmatpush1.msra.mxu0 0.0
    %920 = vmatprep.subr.mxu0 0.0
    %921 = vmatpush1.msra.mxu0 0.0
    %922 = vmatprep.subr.mxu0 0.0
    %923 = vmatpush1.msra.mxu0 0.0
    %924 = vmatprep.subr.mxu0 0.0
    %925 = vmatpush1.msra.mxu0 0.0
    %926 = vmatprep.subr.mxu0 0.0
    %927 = vmatpush1.msra.mxu0 0.0
    %928 = vmatprep.subr.mxu0 0.0
    %929 = vmatpush1.msra.mxu0 0.0
    %930 = vmatprep.subr.mxu0 0.0
    %931 = vmatpush1.msra.mxu0 0.0
    %932 = vmatprep.subr.mxu0 0.0
    %933 = vmatpush1.msra.mxu0 0.0
    %934 = vmatprep.subr.mxu0 0.0
    %935 = vmatpush1.msra.mxu0 0.0
    %936 = vmatprep.subr.mxu0 0.0
    %937 = vmatpush1.msra.mxu0 0.0
    %938 = vmatprep.subr.mxu0 0.0
    %939 = vmatpush1.msra.mxu0 0.0
    %940 = vmatprep.subr.mxu0 0.0
    %941 = vmatpush1.msra.mxu0 0.0
    %942 = vmatprep.mubr.f32.mxu0 0.0
    %943 = vmatmul.mubr.f32.gmra.mrb[0].mxu0 %v876
    %v944 = vpop.f32.mrb[0].mxu0
    %v945 = vadd.f32 0.0, %v944
    %v946 = vpop.f32.mrb[0].mxu0
    %947 = vdwg.mxu0
    %v948 = vadd.f32 %v348, %v945
    %v949 = vtanh.pop %v948
    %950 = vst [vmem:[#allocation2 + $0x38] sm:$0xff] %v949
    %v951 = vld [vmem:[#allocation2] sm:$0xff]
    %v952 = vld [vmem:[#allocation2 + $0x8] sm:$0xff]
    %v953 = vld [vmem:[#allocation2 + $0x10] sm:$0xff]
    %v954 = vld [vmem:[#allocation2 + $0x18] sm:$0xff]
    %v955 = vld [vmem:[#allocation2 + $0x20] sm:$0xff]
    %v956 = vld [vmem:[#allocation2 + $0x28] sm:$0xff]
    %v957 = vld [vmem:[#allocation2 + $0x30] sm:$0xff]
    %v958 = vld [vmem:[#allocation2 + $0x38] sm:$0xff]
    %v959 = vld [vmem:[#allocation3] sm:$0xff]
    %v960 = vld [vmem:[#allocation3 + $0x8] sm:$0xff]
    %v961 = vld [vmem:[#allocation3 + $0x10] sm:$0xff]
    %v962 = vld [vmem:[#allocation3 + $0x18] sm:$0xff]
    %v963 = vld [vmem:[#allocation3 + $0x20] sm:$0xff]
    %v964 = vld [vmem:[#allocation3 + $0x28] sm:$0xff]
    %v965 = vld [vmem:[#allocation3 + $0x30] sm:$0xff]
    %v966 = vld [vmem:[#allocation3 + $0x38] sm:$0xff]
    %v967 = vld [vmem:[#allocation3 + $0x40] sm:$0xff]
    %v968 = vld [vmem:[#allocation3 + $0x48] sm:$0xff]
    %v969 = vld [vmem:[#allocation3 + $0x50] sm:$0xff]
    %v970 = vld [vmem:[#allocation3 + $0x58] sm:$0xff]
    %v971 = vld [vmem:[#allocation3 + $0x60] sm:$0xff]
    %v972 = vld [vmem:[#allocation3 + $0x68] sm:$0xff]
    %v973 = vld [vmem:[#allocation3 + $0x70] sm:$0xff]
    %v974 = vld [vmem:[#allocation3 + $0x78] sm:$0xff]
    %v975 = vld [vmem:[%s5] sm:$0x1]
    %v977 = vlaneseq
    %v978 = vshrl.u32 %v977, 7
    %v979 = vsub.s32 0, %v978
    %v980 = vrot.slane %v975, %v979
    %982 = vmatprep.subr.mxu0 0.0
    %983 = vmatpush1.msra.mxu0 %v959
    %984 = vmatprep.subr.mxu0 0.0
    %985 = vmatpush1.msra.mxu0 %v960
    %986 = vmatprep.subr.mxu0 0.0
    %987 = vmatpush1.msra.mxu0 %v961
    %988 = vmatprep.subr.mxu0 0.0
    %989 = vmatpush1.msra.mxu0 %v962
    %990 = vmatprep.subr.mxu0 0.0
    %991 = vmatpush1.msra.mxu0 %v963
    %992 = vmatprep.subr.mxu0 0.0
    %993 = vmatpush1.msra.mxu0 %v964
    %994 = vmatprep.subr.mxu0 0.0
    %995 = vmatpush1.msra.mxu0 %v965
    %996 = vmatprep.subr.mxu0 0.0
    %997 = vmatpush1.msra.mxu0 %v966
    %998 = vmatprep.subr.mxu0 0.0
    %999 = vmatpush1.msra.mxu0 %v967
    %1000 = vmatprep.subr.mxu0 0.0
    %1001 = vmatpush1.msra.mxu0 %v968
    %1002 = vmatprep.subr.mxu0 0.0
    %1003 = vmatpush1.msra.mxu0 %v969
    %1004 = vmatprep.subr.mxu0 0.0
    %1005 = vmatpush1.msra.mxu0 %v970
    %1006 = vmatprep.subr.mxu0 0.0
    %1007 = vmatpush1.msra.mxu0 %v971
    %1008 = vmatprep.subr.mxu0 0.0
    %1009 = vmatpush1.msra.mxu0 %v972
    %1010 = vmatprep.subr.mxu0 0.0
    %1011 = vmatpush1.msra.mxu0 %v973
    %1012 = vmatprep.subr.mxu0 0.0
    %1013 = vmatpush1.msra.mxu0 %v974
    %1014 = vmatprep.subr.mxu0 0.0
    %1015 = vmatpush1.msra.mxu0 0.0
    %1016 = vmatprep.subr.mxu0 0.0
    %1017 = vmatpush1.msra.mxu0 0.0
    %1018 = vmatprep.subr.mxu0 0.0
    %1019 = vmatpush1.msra.mxu0 0.0
    %1020 = vmatprep.subr.mxu0 0.0
    %1021 = vmatpush1.msra.mxu0 0.0
    %1022 = vmatprep.subr.mxu0 0.0
    %1023 = vmatpush1.msra.mxu0 0.0
    %1024 = vmatprep.subr.mxu0 0.0
    %1025 = vmatpush1.msra.mxu0 0.0
    %1026 = vmatprep.subr.mxu0 0.0
    %1027 = vmatpush1.msra.mxu0 0.0
    %1028 = vmatprep.subr.mxu0 0.0
    %1029 = vmatpush1.msra.mxu0 0.0
    %1030 = vmatprep.subr.mxu0 0.0
    %1031 = vmatpush1.msra.mxu0 0.0
    %1032 = vmatprep.subr.mxu0 0.0
    %1033 = vmatpush1.msra.mxu0 0.0
    %1034 = vmatprep.subr.mxu0 0.0
    %1035 = vmatpush1.msra.mxu0 0.0
    %1036 = vmatprep.subr.mxu0 0.0
    %1037 = vmatpush1.msra.mxu0 0.0
    %1038 = vmatprep.subr.mxu0 0.0
    %1039 = vmatpush1.msra.mxu0 0.0
    %1040 = vmatprep.subr.mxu0 0.0
    %1041 = vmatpush1.msra.mxu0 0.0
    %1042 = vmatprep.subr.mxu0 0.0
    %1043 = vmatpush1.msra.mxu0 0.0
    %1044 = vmatprep.subr.mxu0 0.0
    %1045 = vmatpush1.msra.mxu0 0.0
    %1046 = vmatprep.mubr.f32.mxu0 0.0
    %1047 = vmatmul.mubr.f32.gmra.mrb[0].mxu0 %v951
    %v1048 = vpop.f32.mrb[0].mxu0
    %v1049 = vadd.f32 %v980, %v1048
    %v1050 = vpop.f32.mrb[0].mxu0
    %1051 = vmatprep.mubr.f32.mxu0 0.0
    %1052 = vmatmul.mubr.f32.gmra.mrb[0].mxu0 %v952
    %v1053 = vpop.f32.mrb[0].mxu0
    %v1054 = vadd.f32 %v980, %v1053
    %v1055 = vpop.f32.mrb[0].mxu0
    %1056 = vmatprep.mubr.f32.mxu0 0.0
    %1057 = vmatmul.mubr.f32.gmra.mrb[0].mxu0 %v953
    %v1058 = vpop.f32.mrb[0].mxu0
    %v1059 = vadd.f32 %v980, %v1058
    %v1060 = vpop.f32.mrb[0].mxu0
    %1061 = vmatprep.mubr.f32.mxu0 0.0
    %1062 = vmatmul.mubr.f32.gmra.mrb[0].mxu0 %v954
    %v1063 = vpop.f32.mrb[0].mxu0
    %v1064 = vadd.f32 %v980, %v1063
    %v1065 = vpop.f32.mrb[0].mxu0
    %1066 = vmatprep.mubr.f32.mxu0 0.0
    %1067 = vmatmul.mubr.f32.gmra.mrb[0].mxu0 %v955
    %v1068 = vpop.f32.mrb[0].mxu0
    %v1069 = vadd.f32 %v980, %v1068
    %v1070 = vpop.f32.mrb[0].mxu0
    %1071 = vmatprep.mubr.f32.mxu0 0.0
    %1072 = vmatmul.mubr.f32.gmra.mrb[0].mxu0 %v956
    %v1073 = vpop.f32.mrb[0].mxu0
    %v1074 = vadd.f32 %v980, %v1073
    %v1075 = vpop.f32.mrb[0].mxu0
    %1076 = vmatprep.mubr.f32.mxu0 0.0
    %1077 = vmatmul.mubr.f32.gmra.mrb[0].mxu0 %v957
    %v1078 = vpop.f32.mrb[0].mxu0
    %v1079 = vadd.f32 %v980, %v1078
    %v1080 = vpop.f32.mrb[0].mxu0
    %1081 = vmatprep.mubr.f32.mxu0 0.0
    %1082 = vmatmul.mubr.f32.gmra.mrb[0].mxu0 %v958
    %v1083 = vpop.f32.mrb[0].mxu0
    %v1084 = vadd.f32 %v980, %v1083
    %v1085 = vpop.f32.mrb[0].mxu0
    %1086 = vdwg.mxu0
    %v1087 = vmax.f32 %v1049, %v1069
    %v1088 = vmax.f32 %v1054, %v1074
    %v1089 = vmax.f32 %v1059, %v1079
    %v1090 = vmax.f32 %v1064, %v1084
    %v1091 = vmax.f32 %v1087, %v1088
    %v1092 = vmax.f32 %v1089, %v1090
    %v1093 = vmax.f32 %v1091, %v1092
    %v1094 = vsub.f32 %v1049, %v1093
    %v1095 = vsub.f32 %v1054, %v1093
    %v1096 = vsub.f32 %v1059, %v1093
    %v1097 = vsub.f32 %v1064, %v1093
    %v1098 = vsub.f32 %v1069, %v1093
    %v1099 = vsub.f32 %v1074, %v1093
    %v1100 = vsub.f32 %v1079, %v1093
    %v1101 = vsub.f32 %v1084, %v1093
    %v1102 = vmul.f32 %v1094, 1.442695
    %v1103 = vpow.pop %v1102
    %v1104 = vmul.f32 %v1095, 1.442695
    %v1105 = vpow.pop %v1104
    %v1106 = vmul.f32 %v1096, 1.442695
    %v1107 = vpow.pop %v1106
    %v1108 = vmul.f32 %v1097, 1.442695
    %v1109 = vpow.pop %v1108
    %v1110 = vmul.f32 %v1098, 1.442695
    %v1111 = vpow.pop %v1110
    %v1112 = vmul.f32 %v1099, 1.442695
    %v1113 = vpow.pop %v1112
    %v1114 = vmul.f32 %v1100, 1.442695
    %v1115 = vpow.pop %v1114
    %v1116 = vmul.f32 %v1101, 1.442695
    %v1117 = vpow.pop %v1116
    %v1118 = vadd.f32 %v1103, %v1105
    %v1119 = vadd.f32 %v1118, %v1107
    %v1120 = vadd.f32 %v1119, %v1109
    %v1121 = vadd.f32 %v1120, %v1111
    %v1122 = vadd.f32 %v1121, %v1113
    %v1123 = vadd.f32 %v1122, %v1115
    %v1124 = vadd.f32 %v1123, %v1117
    %v1125 = vrcp.pop %v1124
    %v1126 = vmul.f32 %v1103, %v1125
    %v1127 = vmul.f32 %v1105, %v1125
    %v1128 = vmul.f32 %v1107, %v1125
    %v1129 = vmul.f32 %v1109, %v1125
    %v1130 = vmul.f32 %v1111, %v1125
    %v1131 = vmul.f32 %v1113, %v1125
    %v1132 = vmul.f32 %v1115, %v1125
    %v1133 = vmul.f32 %v1117, %v1125
    %1134 = vst [vmem:[#allocation6] sm:$0xff] %v1126
    %1135 = vst [vmem:[#allocation6 + $0x8] sm:$0xff] %v1127
    %1136 = vst [vmem:[#allocation6 + $0x10] sm:$0xff] %v1128
    %1137 = vst [vmem:[#allocation6 + $0x18] sm:$0xff] %v1129
    %1138 = vst [vmem:[#allocation6 + $0x20] sm:$0xff] %v1130
    %1139 = vst [vmem:[#allocation6 + $0x28] sm:$0xff] %v1131
    %1140 = vst [vmem:[#allocation6 + $0x30] sm:$0xff] %v1132
    %1141 = vst [vmem:[#allocation6 + $0x38] sm:$0xff] %v1133
    // Predicated region
    $region30: #{tpu_custom_call.1} parent=1 // pred_check
      _
    $region31: #{tpu_custom_call.1} parent=1 // pred_check_branch
      %1143 = sbr.rel (0) target = $region33
    $region32: #{tpu_custom_call.1} parent=1 // pred_region
      %s1145 = ssub.s32 1024, 1024
      %1146 = vsyncadd [#allocation5], %s1145
      %s1147 = sshll.u32 [#allocation6], 4
      %s1148 = int_to_ptr.vmem [resolvable:$true] %s1147
      %1153 = dma.vmem_to_hbm [thread:$0]  %s1148, 1024, %s6, [#allocation5], 128, 128, 8
    $region33: #{tpu_custom_call.1} parent=1 // pred_fallthru
      _
    // Predicated region
    $region34: #{tpu_custom_call.1} parent=1 // pred_check
      _
    $region35: #{tpu_custom_call.1} parent=1 // pred_check_branch
      %1155 = sbr.rel (0) target = $region37
    $region36: #{tpu_custom_call.1} parent=1 // pred_region
      %1156 = dma.done [#allocation5], 1024
    $region37: #{tpu_custom_call.1} parent=1 // pred_fallthru
      _
    %1157 = vsyncpa [#allocation4], 1
    %1158 = vsyncpa [#allocation5], 1

</llo_original>
